<compile_context>
chip_gen: v5e
topology: v5e:2x2
jax: 0.10.0
libtpu: 0.0.40
codegen_flags: <defaults>
</compile_context>

<pallas_src>
import numpy as np
import jax
import jax.numpy as jnp
from jax.experimental import pallas as pl
from jax.experimental.pallas import tpu as pltpu


def _make_encoder_kernel(N, Hp, Wp, Cin, Cout, K, eps, mxu_dtype):
    """Builds the fused [conv -> BN -> ReLU] x 2 kernel for static shapes."""
    P = (K - 1) // 2
    rows = N * Hp * Wp
    inv_n = 1.0 / float(rows)

    def make_patches(src, mask):
        # src: (C, rows) f32 -> patches (K*K*C, rows) in mxu_dtype.
        # 'SAME' zero-padding is realized as lane roll (XLU) + {0,1} mask multiply
        # (VPU): no padded scratch buffer, everything stays lane-dense.
        taps = []
        t = 0
        for ky in range(K):
            for kx in range(K):
                delta = (ky - P) * Wp + (kx - P)   # flat row-index shift of this tap
                if delta == 0:
                    shifted = src
                else:
                    shifted = pltpu.roll(src, shift=(-delta) % rows, axis=1)
                taps.append(shifted * mask[t:t + 1, :])
                t += 1
        # Sublane-axis concat; one cast to the MXU operand dtype right before the dot.
        return jnp.concatenate(taps, axis=0).astype(mxu_dtype)

    def bn_relu(y, gamma, beta):
        # Training-mode BatchNorm (biased batch stats over N,H,W == lane axis),
        # two-pass variance, folded scale/shift, fused ReLU.
        mean = jnp.sum(y, axis=1, keepdims=True) * inv_n           # (Cout, 1)
        d = y - mean
        var = jnp.sum(d * d, axis=1, keepdims=True) * inv_n        # (Cout, 1)
        scale = gamma * jax.lax.rsqrt(var + eps)                   # EUP rsqrt
        return jnp.maximum(d * scale + beta, 0.0)

    def kernel(x_ref, mask_ref, w1_ref, g1_ref, be1_ref, w2_ref, g2_ref, be2_ref,
               o_ref):
        mask = mask_ref[...]                                       # (K*K, rows) f32

        # ---- conv1: channel-major im2col (roll + mask) + single MXU matmul ----
        p1 = make_patches(x_ref[...], mask)                        # (K*K*Cin, rows)
        y1 = jnp.dot(w1_ref[...], p1, preferred_element_type=jnp.float32)
        h1 = bn_relu(y1, g1_ref[...], be1_ref[...])                # (Cout, rows) f32

        # ---- conv2 (conv bias cancels under training-mode BN) ----
        p2 = make_patches(h1, mask)                                # (K*K*Cout, rows)
        y2 = jnp.dot(w2_ref[...], p2, preferred_element_type=jnp.float32)
        o_ref[...] = bn_relu(y2, g2_ref[...], be2_ref[...])        # lane-dense store

    return kernel


def _tap_masks(N, Hp, Wp, K):
    """(K*K, N*Hp*Wp) f32 {0,1} masks: is tap (ky,kx) in-bounds at each output pixel."""
    P = (K - 1) // 2
    rows = N * Hp * Wp
    r = np.arange(rows)
    y = (r // Wp) % Hp
    x = r % Wp
    masks = []
    for ky in range(K):
        for kx in range(K):
            dy, dx = ky - P, kx - P
            ok = (y + dy >= 0) & (y + dy < Hp) & (x + dx >= 0) & (x + dx < Wp)
            masks.append(ok.astype(np.float32))
    return jnp.asarray(np.stack(masks, axis=0))


def encoder_forward(x_nchw, params, depth, *, mxu_dtype=jnp.bfloat16):
    """x_nchw: (N, Cin, H, W) float32 (PyTorch layout). Returns (N, Cout, H', W')."""
    w1, b1, g1, be1, w2, b2, g2, be2 = params
    del b1, b2  # per-channel conv bias cancels exactly under training-mode BatchNorm

    x = x_nchw.astype(jnp.float32)
    N, Cin, H, W = x.shape
    if depth > 0:
        # MaxPool2d(2,2) in the wrapper; floor odd spatial sizes like PyTorch.
        Hf, Wf = (H // 2) * 2, (W // 2) * 2
        x = x[:, :, :Hf, :Wf].reshape(N, Cin, Hf // 2, 2, Wf // 2, 2).max(axis=(3, 5))
    N, Cin, Hp, Wp = x.shape
    K, Cout = w1.shape[0], w1.shape[3]
    rows = N * Hp * Wp

    # Channel-major, lane-dense layouts: rows = N*Hp*Wp rides the 128-lane axis.
    x_cm = jnp.transpose(x, (1, 0, 2, 3)).reshape(Cin, rows)
    # Weights as (Cout, K*K*C) matching the tap-major / channel-minor patch order;
    # MXU operands cast once, in the wrapper.
    w1m = jnp.transpose(w1.reshape(K * K * Cin, Cout)).astype(mxu_dtype)
    w2m = jnp.transpose(w2.reshape(K * K * Cout, Cout)).astype(mxu_dtype)
    mask = _tap_masks(N, Hp, Wp, K)

    kernel = _make_encoder_kernel(N, Hp, Wp, Cin, Cout, K, 1e-5, mxu_dtype)
    vmem = pl.BlockSpec(memory_space=pltpu.MemorySpace.VMEM)

    out_cm = pl.pallas_call(
        kernel,
        out_shape=jax.ShapeDtypeStruct((Cout, rows), jnp.float32),
        in_specs=[vmem] * 8,
        out_specs=vmem,
        compiler_params=pltpu.CompilerParams(vmem_limit_bytes=32 * 1024 * 1024),
    )(x_cm, mask, w1m,
      g1.reshape(-1, 1).astype(jnp.float32), be1.reshape(-1, 1).astype(jnp.float32),
      w2m,
      g2.reshape(-1, 1).astype(jnp.float32), be2.reshape(-1, 1).astype(jnp.float32))

    # (Cout, N*Hp*Wp) -> (N, Cout, Hp, Wp) NCHW.
    return jnp.transpose(out_cm.reshape(Cout, N, Hp, Wp), (1, 0, 2, 3))


def encoder_reference(x_nchw, params, depth):
    """Pure-JAX reference with the same semantics (for sanity checking)."""
    (w1, b1, g1, be1, w2, b2, g2, be2) = params
    x = jnp.transpose(x_nchw, (0, 2, 3, 1)).astype(jnp.float32)
    if depth > 0:
        x = jnp.maximum(jnp.maximum(x[:, 0::2, 0::2, :], x[:, 0::2, 1::2, :]),
                        jnp.maximum(x[:, 1::2, 0::2, :], x[:, 1::2, 1::2, :]))

    def cbr(x, w, b, g, be):
        y = jax.lax.conv_general_dilated(
            x, w, window_strides=(1, 1), padding='SAME',
            dimension_numbers=('NHWC', 'HWIO', 'NHWC'),
            precision=jax.lax.Precision.HIGHEST) + b
        m = y.mean(axis=(0, 1, 2), keepdims=True)
        v = ((y - m) ** 2).mean(axis=(0, 1, 2), keepdims=True)
        y = (y - m) / jnp.sqrt(v + 1e-5) * g + be
        return jnp.maximum(y, 0.0)

    y = cbr(x, w1, b1, g1, be1)
    y = cbr(y, w2, b2, g2, be2)
    return jnp.transpose(y, (0, 3, 1, 2))


if __name__ == "__main__":
    # Module config: Encoder(depth=1, in_channels=4, out_channels=8, kernel_size=3, batch_norm=True)
    depth, Cin, Cout, K = 1, 4, 8, 3
    N, H, W = 2, 16, 16

    key = jax.random.PRNGKey(0)
    ks = jax.random.split(key, 9)
    w1 = 0.2 * jax.random.normal(ks[0], (K, K, Cin, Cout), jnp.float32)   # HWIO
    b1 = 0.1 * jax.random.normal(ks[1], (Cout,), jnp.float32)
    g1 = 1.0 + 0.1 * jax.random.normal(ks[2], (Cout,), jnp.float32)       # BN gamma
    be1 = 0.1 * jax.random.normal(ks[3], (Cout,), jnp.float32)            # BN beta
    g2 = 1.0 + 0.1 * jax.random.normal(ks[6], (Cout,), jnp.float32)
    be2 = 0.1 * jax.random.normal(ks[7], (Cout,), jnp.float32)
    w2 = 0.2 * jax.random.normal(ks[4], (K, K, Cout, Cout), jnp.float32)
    b2 = 0.1 * jax.random.normal(ks[5], (Cout,), jnp.float32)
    params = (w1, b1, g1, be1, w2, b2, g2, be2)

    x = jax.random.normal(ks[8], (N, Cin, H, W), jnp.float32)             # NCHW, like PyTorch

    ref = jax.block_until_ready(encoder_reference(x, params, depth))

    # Accurate mode (f32 MXU operands): tight check against the XLA reference.
    out_f32 = jax.block_until_ready(
        encoder_forward(x, params, depth, mxu_dtype=jnp.float32))
    assert out_f32.shape == (N, Cout, H // 2, W // 2), out_f32.shape
    assert jnp.allclose(out_f32, ref, atol=1e-2, rtol=1e-2), \
        float(jnp.max(jnp.abs(out_f32 - ref)))

    # Fast mode (default): bf16 MXU operands with f32 accumulation / elementwise.
    # bf16 rounding through two conv+BN stages gives ~1e-2-scale deviations, so the
    # check is deliberately loose; the f32 mode above is the strict correctness test.
    out = jax.block_until_ready(encoder_forward(x, params, depth))
    assert out.shape == (N, Cout, H // 2, W // 2), out.shape
    assert jnp.allclose(out, ref, atol=1e-1, rtol=1e-1), \
        float(jnp.max(jnp.abs(out - ref)))

    print("KERNEL_OK")
</pallas_src>

<mosaic_0001>
module attributes {stable_mosaic.version = 11 : i64} {
  func.func @kernel(%arg0: memref<4x128xf32, #tpu.memory_space<vmem>>, %arg1: memref<9x128xf32, #tpu.memory_space<vmem>>, %arg2: memref<8x36xf32, #tpu.memory_space<vmem>>, %arg3: memref<8x1xf32, #tpu.memory_space<vmem>>, %arg4: memref<8x1xf32, #tpu.memory_space<vmem>>, %arg5: memref<8x72xf32, #tpu.memory_space<vmem>>, %arg6: memref<8x1xf32, #tpu.memory_space<vmem>>, %arg7: memref<8x1xf32, #tpu.memory_space<vmem>>, %arg8: memref<8x128xf32, #tpu.memory_space<vmem>>) attributes {dimension_semantics = [], scalar_prefetch = 0 : i64, scratch_operands = 0 : i64, tpu.core_type = #tpu.core_type<tc>} {
    %c0 = arith.constant 0 : index
    %c0_0 = arith.constant 0 : index
    %0 = vector.load %arg1[%c0, %c0_0] : memref<9x128xf32, #tpu.memory_space<vmem>>, vector<9x128xf32>
    %c0_1 = arith.constant 0 : index
    %c0_2 = arith.constant 0 : index
    %1 = vector.load %arg0[%c0_1, %c0_2] : memref<4x128xf32, #tpu.memory_space<vmem>>, vector<4x128xf32>
    %c9_i32 = arith.constant 9 : i32
    %2 = tpu.dynamic_rotate %1 by %c9_i32 dim 1 : vector<4x128xf32>, i32 -> vector<4x128xf32>
    %3 = vector.extract_strided_slice %0 {offsets = [0, 0], sizes = [1, 128], strides = [1, 1]} : vector<9x128xf32> to vector<1x128xf32>
    %4 = vector.broadcast %3 : vector<1x128xf32> to vector<4x128xf32>
    %5 = arith.mulf %2, %4 : vector<4x128xf32>
    %c8_i32 = arith.constant 8 : i32
    %6 = tpu.dynamic_rotate %1 by %c8_i32 dim 1 : vector<4x128xf32>, i32 -> vector<4x128xf32>
    %7 = vector.extract_strided_slice %0 {offsets = [1, 0], sizes = [1, 128], strides = [1, 1]} : vector<9x128xf32> to vector<1x128xf32>
    %8 = vector.broadcast %7 : vector<1x128xf32> to vector<4x128xf32>
    %9 = arith.mulf %6, %8 : vector<4x128xf32>
    %c7_i32 = arith.constant 7 : i32
    %10 = tpu.dynamic_rotate %1 by %c7_i32 dim 1 : vector<4x128xf32>, i32 -> vector<4x128xf32>
    %11 = vector.extract_strided_slice %0 {offsets = [2, 0], sizes = [1, 128], strides = [1, 1]} : vector<9x128xf32> to vector<1x128xf32>
    %12 = vector.broadcast %11 : vector<1x128xf32> to vector<4x128xf32>
    %13 = arith.mulf %10, %12 : vector<4x128xf32>
    %c1_i32 = arith.constant 1 : i32
    %14 = tpu.dynamic_rotate %1 by %c1_i32 dim 1 : vector<4x128xf32>, i32 -> vector<4x128xf32>
    %15 = vector.extract_strided_slice %0 {offsets = [3, 0], sizes = [1, 128], strides = [1, 1]} : vector<9x128xf32> to vector<1x128xf32>
    %16 = vector.broadcast %15 : vector<1x128xf32> to vector<4x128xf32>
    %17 = arith.mulf %14, %16 : vector<4x128xf32>
    %18 = vector.extract_strided_slice %0 {offsets = [4, 0], sizes = [1, 128], strides = [1, 1]} : vector<9x128xf32> to vector<1x128xf32>
    %19 = vector.broadcast %18 : vector<1x128xf32> to vector<4x128xf32>
    %20 = arith.mulf %1, %19 : vector<4x128xf32>
    %c127_i32 = arith.constant 127 : i32
    %21 = tpu.dynamic_rotate %1 by %c127_i32 dim 1 : vector<4x128xf32>, i32 -> vector<4x128xf32>
    %22 = vector.extract_strided_slice %0 {offsets = [5, 0], sizes = [1, 128], strides = [1, 1]} : vector<9x128xf32> to vector<1x128xf32>
    %23 = vector.broadcast %22 : vector<1x128xf32> to vector<4x128xf32>
    %24 = arith.mulf %21, %23 : vector<4x128xf32>
    %c121_i32 = arith.constant 121 : i32
    %25 = tpu.dynamic_rotate %1 by %c121_i32 dim 1 : vector<4x128xf32>, i32 -> vector<4x128xf32>
    %26 = vector.extract_strided_slice %0 {offsets = [6, 0], sizes = [1, 128], strides = [1, 1]} : vector<9x128xf32> to vector<1x128xf32>
    %27 = vector.broadcast %26 : vector<1x128xf32> to vector<4x128xf32>
    %28 = arith.mulf %25, %27 : vector<4x128xf32>
    %c120_i32 = arith.constant 120 : i32
    %29 = tpu.dynamic_rotate %1 by %c120_i32 dim 1 : vector<4x128xf32>, i32 -> vector<4x128xf32>
    %30 = vector.extract_strided_slice %0 {offsets = [7, 0], sizes = [1, 128], strides = [1, 1]} : vector<9x128xf32> to vector<1x128xf32>
    %31 = vector.broadcast %30 : vector<1x128xf32> to vector<4x128xf32>
    %32 = arith.mulf %29, %31 : vector<4x128xf32>
    %c119_i32 = arith.constant 119 : i32
    %33 = tpu.dynamic_rotate %1 by %c119_i32 dim 1 : vector<4x128xf32>, i32 -> vector<4x128xf32>
    %34 = vector.extract_strided_slice %0 {offsets = [8, 0], sizes = [1, 128], strides = [1, 1]} : vector<9x128xf32> to vector<1x128xf32>
    %35 = vector.broadcast %34 : vector<1x128xf32> to vector<4x128xf32>
    %36 = arith.mulf %33, %35 : vector<4x128xf32>
    %37 = tpu.concatenate %5, %9, %13, %17, %20, %24, %28, %32, %36 in 0 : vector<4x128xf32>, vector<4x128xf32>, vector<4x128xf32>, vector<4x128xf32>, vector<4x128xf32>, vector<4x128xf32>, vector<4x128xf32>, vector<4x128xf32>, vector<4x128xf32> -> vector<36x128xf32>
    %c0_3 = arith.constant 0 : index
    %c0_4 = arith.constant 0 : index
    %38 = vector.load %arg2[%c0_3, %c0_4] : memref<8x36xf32, #tpu.memory_space<vmem>>, vector<8x36xf32>
    %cst = arith.constant dense<0.000000e+00> : vector<8x128xf32>
    %39 = tpu.matmul %38, %37, %cst {dimension_numbers = #tpu.dot_dimension_numbers<[1], [0], [0], [1], [0, 0, 1, 1], [], []>} : vector<8x36xf32>, vector<36x128xf32>, vector<8x128xf32> -> vector<8x128xf32>
    %c0_5 = arith.constant 0 : index
    %c0_6 = arith.constant 0 : index
    %40 = vector.load %arg3[%c0_5, %c0_6] : memref<8x1xf32, #tpu.memory_space<vmem>>, vector<8x1xf32>
    %c0_7 = arith.constant 0 : index
    %c0_8 = arith.constant 0 : index
    %41 = vector.load %arg4[%c0_7, %c0_8] : memref<8x1xf32, #tpu.memory_space<vmem>>, vector<8x1xf32>
    %cst_9 = arith.constant dense<0.000000e+00> : vector<8xf32>
    %42 = vector.multi_reduction <add>, %39, %cst_9 [1] : vector<8x128xf32> to vector<8xf32>
    %43 = vector.shape_cast %42 : vector<8xf32> to vector<8x1xf32>
    %cst_10 = arith.constant 7.812500e-03 : f32
    %44 = vector.broadcast %cst_10 : f32 to vector<8x1xf32>
    %45 = arith.mulf %43, %44 : vector<8x1xf32>
    %46 = vector.broadcast %45 : vector<8x1xf32> to vector<8x128xf32>
    %47 = arith.subf %39, %46 : vector<8x128xf32>
    %48 = arith.mulf %47, %47 : vector<8x128xf32>
    %cst_11 = arith.constant dense<0.000000e+00> : vector<8xf32>
    %49 = vector.multi_reduction <add>, %48, %cst_11 [1] : vector<8x128xf32> to vector<8xf32>
    %50 = vector.shape_cast %49 : vector<8xf32> to vector<8x1xf32>
    %cst_12 = arith.constant 7.812500e-03 : f32
    %51 = vector.broadcast %cst_12 : f32 to vector<8x1xf32>
    %52 = arith.mulf %50, %51 : vector<8x1xf32>
    %cst_13 = arith.constant 9.99999974E-6 : f32
    %53 = vector.broadcast %cst_13 : f32 to vector<8x1xf32>
    %54 = arith.addf %52, %53 : vector<8x1xf32>
    %55 = math.rsqrt %54 : vector<8x1xf32>
    %56 = arith.mulf %40, %55 : vector<8x1xf32>
    %57 = vector.broadcast %56 : vector<8x1xf32> to vector<8x128xf32>
    %58 = arith.mulf %47, %57 : vector<8x128xf32>
    %59 = vector.broadcast %41 : vector<8x1xf32> to vector<8x128xf32>
    %60 = arith.addf %58, %59 : vector<8x128xf32>
    %cst_14 = arith.constant 0.000000e+00 : f32
    %61 = vector.broadcast %cst_14 : f32 to vector<8x128xf32>
    %62 = arith.maximumf %60, %61 : vector<8x128xf32>
    %c9_i32_15 = arith.constant 9 : i32
    %63 = tpu.dynamic_rotate %62 by %c9_i32_15 dim 1 : vector<8x128xf32>, i32 -> vector<8x128xf32>
    %64 = vector.extract_strided_slice %0 {offsets = [0, 0], sizes = [1, 128], strides = [1, 1]} : vector<9x128xf32> to vector<1x128xf32>
    %65 = vector.broadcast %64 : vector<1x128xf32> to vector<8x128xf32>
    %66 = arith.mulf %63, %65 : vector<8x128xf32>
    %c8_i32_16 = arith.constant 8 : i32
    %67 = tpu.dynamic_rotate %62 by %c8_i32_16 dim 1 : vector<8x128xf32>, i32 -> vector<8x128xf32>
    %68 = vector.extract_strided_slice %0 {offsets = [1, 0], sizes = [1, 128], strides = [1, 1]} : vector<9x128xf32> to vector<1x128xf32>
    %69 = vector.broadcast %68 : vector<1x128xf32> to vector<8x128xf32>
    %70 = arith.mulf %67, %69 : vector<8x128xf32>
    %c7_i32_17 = arith.constant 7 : i32
    %71 = tpu.dynamic_rotate %62 by %c7_i32_17 dim 1 : vector<8x128xf32>, i32 -> vector<8x128xf32>
    %72 = vector.extract_strided_slice %0 {offsets = [2, 0], sizes = [1, 128], strides = [1, 1]} : vector<9x128xf32> to vector<1x128xf32>
    %73 = vector.broadcast %72 : vector<1x128xf32> to vector<8x128xf32>
    %74 = arith.mulf %71, %73 : vector<8x128xf32>
    %c1_i32_18 = arith.constant 1 : i32
    %75 = tpu.dynamic_rotate %62 by %c1_i32_18 dim 1 : vector<8x128xf32>, i32 -> vector<8x128xf32>
    %76 = vector.extract_strided_slice %0 {offsets = [3, 0], sizes = [1, 128], strides = [1, 1]} : vector<9x128xf32> to vector<1x128xf32>
    %77 = vector.broadcast %76 : vector<1x128xf32> to vector<8x128xf32>
    %78 = arith.mulf %75, %77 : vector<8x128xf32>
    %79 = vector.extract_strided_slice %0 {offsets = [4, 0], sizes = [1, 128], strides = [1, 1]} : vector<9x128xf32> to vector<1x128xf32>
    %80 = vector.broadcast %79 : vector<1x128xf32> to vector<8x128xf32>
    %81 = arith.mulf %62, %80 : vector<8x128xf32>
    %c127_i32_19 = arith.constant 127 : i32
    %82 = tpu.dynamic_rotate %62 by %c127_i32_19 dim 1 : vector<8x128xf32>, i32 -> vector<8x128xf32>
    %83 = vector.extract_strided_slice %0 {offsets = [5, 0], sizes = [1, 128], strides = [1, 1]} : vector<9x128xf32> to vector<1x128xf32>
    %84 = vector.broadcast %83 : vector<1x128xf32> to vector<8x128xf32>
    %85 = arith.mulf %82, %84 : vector<8x128xf32>
    %c121_i32_20 = arith.constant 121 : i32
    %86 = tpu.dynamic_rotate %62 by %c121_i32_20 dim 1 : vector<8x128xf32>, i32 -> vector<8x128xf32>
    %87 = vector.extract_strided_slice %0 {offsets = [6, 0], sizes = [1, 128], strides = [1, 1]} : vector<9x128xf32> to vector<1x128xf32>
    %88 = vector.broadcast %87 : vector<1x128xf32> to vector<8x128xf32>
    %89 = arith.mulf %86, %88 : vector<8x128xf32>
    %c120_i32_21 = arith.constant 120 : i32
    %90 = tpu.dynamic_rotate %62 by %c120_i32_21 dim 1 : vector<8x128xf32>, i32 -> vector<8x128xf32>
    %91 = vector.extract_strided_slice %0 {offsets = [7, 0], sizes = [1, 128], strides = [1, 1]} : vector<9x128xf32> to vector<1x128xf32>
    %92 = vector.broadcast %91 : vector<1x128xf32> to vector<8x128xf32>
    %93 = arith.mulf %90, %92 : vector<8x128xf32>
    %c119_i32_22 = arith.constant 119 : i32
    %94 = tpu.dynamic_rotate %62 by %c119_i32_22 dim 1 : vector<8x128xf32>, i32 -> vector<8x128xf32>
    %95 = vector.extract_strided_slice %0 {offsets = [8, 0], sizes = [1, 128], strides = [1, 1]} : vector<9x128xf32> to vector<1x128xf32>
    %96 = vector.broadcast %95 : vector<1x128xf32> to vector<8x128xf32>
    %97 = arith.mulf %94, %96 : vector<8x128xf32>
    %98 = tpu.concatenate %66, %70, %74, %78, %81, %85, %89, %93, %97 in 0 : vector<8x128xf32>, vector<8x128xf32>, vector<8x128xf32>, vector<8x128xf32>, vector<8x128xf32>, vector<8x128xf32>, vector<8x128xf32>, vector<8x128xf32>, vector<8x128xf32> -> vector<72x128xf32>
    %c0_23 = arith.constant 0 : index
    %c0_24 = arith.constant 0 : index
    %99 = vector.load %arg5[%c0_23, %c0_24] : memref<8x72xf32, #tpu.memory_space<vmem>>, vector<8x72xf32>
    %cst_25 = arith.constant dense<0.000000e+00> : vector<8x128xf32>
    %100 = tpu.matmul %99, %98, %cst_25 {dimension_numbers = #tpu.dot_dimension_numbers<[1], [0], [0], [1], [0, 0, 1, 1], [], []>} : vector<8x72xf32>, vector<72x128xf32>, vector<8x128xf32> -> vector<8x128xf32>
    %c0_26 = arith.constant 0 : index
    %c0_27 = arith.constant 0 : index
    %101 = vector.load %arg6[%c0_26, %c0_27] : memref<8x1xf32, #tpu.memory_space<vmem>>, vector<8x1xf32>
    %c0_28 = arith.constant 0 : index
    %c0_29 = arith.constant 0 : index
    %102 = vector.load %arg7[%c0_28, %c0_29] : memref<8x1xf32, #tpu.memory_space<vmem>>, vector<8x1xf32>
    %cst_30 = arith.constant dense<0.000000e+00> : vector<8xf32>
    %103 = vector.multi_reduction <add>, %100, %cst_30 [1] : vector<8x128xf32> to vector<8xf32>
    %104 = vector.shape_cast %103 : vector<8xf32> to vector<8x1xf32>
    %cst_31 = arith.constant 7.812500e-03 : f32
    %105 = vector.broadcast %cst_31 : f32 to vector<8x1xf32>
    %106 = arith.mulf %104, %105 : vector<8x1xf32>
    %107 = vector.broadcast %106 : vector<8x1xf32> to vector<8x128xf32>
    %108 = arith.subf %100, %107 : vector<8x128xf32>
    %109 = arith.mulf %108, %108 : vector<8x128xf32>
    %cst_32 = arith.constant dense<0.000000e+00> : vector<8xf32>
    %110 = vector.multi_reduction <add>, %109, %cst_32 [1] : vector<8x128xf32> to vector<8xf32>
    %111 = vector.shape_cast %110 : vector<8xf32> to vector<8x1xf32>
    %cst_33 = arith.constant 7.812500e-03 : f32
    %112 = vector.broadcast %cst_33 : f32 to vector<8x1xf32>
    %113 = arith.mulf %111, %112 : vector<8x1xf32>
    %cst_34 = arith.constant 9.99999974E-6 : f32
    %114 = vector.broadcast %cst_34 : f32 to vector<8x1xf32>
    %115 = arith.addf %113, %114 : vector<8x1xf32>
    %116 = math.rsqrt %115 : vector<8x1xf32>
    %117 = arith.mulf %101, %116 : vector<8x1xf32>
    %118 = vector.broadcast %117 : vector<8x1xf32> to vector<8x128xf32>
    %119 = arith.mulf %108, %118 : vector<8x128xf32>
    %120 = vector.broadcast %102 : vector<8x1xf32> to vector<8x128xf32>
    %121 = arith.addf %119, %120 : vector<8x128xf32>
    %cst_35 = arith.constant 0.000000e+00 : f32
    %122 = vector.broadcast %cst_35 : f32 to vector<8x128xf32>
    %123 = arith.maximumf %121, %122 : vector<8x128xf32>
    %c0_36 = arith.constant 0 : index
    %c0_37 = arith.constant 0 : index
    %124 = vector.load %arg8[%c0_36, %c0_37] : memref<8x128xf32, #tpu.memory_space<vmem>>, vector<8x128xf32>
    tpu.vector_store %arg8[%c0_36, %c0_37], %123 {strides = array<i32>} : memref<8x128xf32, #tpu.memory_space<vmem>>, vector<8x128xf32>,
    return
  }
}

</mosaic_0001>

<llo_original>
// kernel: tpu_custom_call.1
$region0: #{tpu_custom_call.1}
  #allocation0 [shape = 'u32[]', space=smem, size = 0x4, offset = 0x4, fixed_abs, tag = 'smem constant byte address 0x4 - core index']
  #allocation1 [shape = 'u32[72,128]{1,0:T(1,128)}', space=vmem, size = 0x9000, scoped, tag = 'internal scratch']
  %s0 = inlined_call_operand.hbm [shape: f32[4,128], index: 0, kind: input, shape index: {}]
  %s1 = inlined_call_operand.vmem [shape: f32[9,128], index: 1, kind: input, shape index: {}]
  %s2 = inlined_call_operand.vmem [shape: f32[8,36], index: 2, kind: input, shape index: {}]
  %s3 = inlined_call_operand.vmem [shape: f32[8,1], index: 3, kind: input, shape index: {}]
  %s4 = inlined_call_operand.vmem [shape: f32[8,1], index: 4, kind: input, shape index: {}]
  %s5 = inlined_call_operand.vmem [shape: f32[8,72], index: 5, kind: input, shape index: {}]
  %s6 = inlined_call_operand.vmem [shape: f32[8,1], index: 6, kind: input, shape index: {}]
  %s7 = inlined_call_operand.vmem [shape: f32[8,1], index: 7, kind: input, shape index: {}]
  %s8 = inlined_call_operand.hbm [shape: f32[8,128], index: 8, kind: output, shape index: {}]
  %s9 = sld [smem:[#allocation0]]
  $region46: #{tpu_custom_call.1} parent=0
    _
  %s11 = ssub.s32 1, %s9
  %s12 = scalar_select 0, %s11, %s9
  $region1: #{tpu_custom_call.1} parent=0
    #allocation2 [shape = 'u8[2048]{0}', space=vmem, size = 0x800, scoped, tag = 'input window, operand 0, single buffered']
    #allocation3 [shape = 's32[1]{0}', space=sflag, size = 0x4, scoped, tag = 'scoped memory for tpu_custom_call.1']
    #allocation4 [shape = 's32[1]{0}', space=sflag, size = 0x4, scoped, tag = 'scoped memory for tpu_custom_call.1']
    #allocation5 [shape = 'u8[4096]{0}', space=vmem, size = 0x1000, scoped, tag = 'output window, operand 0, single buffered']
    %13 = vsyncpa [#allocation3], 0
    %14 = vsyncpa [#allocation4], 0
    // Predicated region
    $region2: #{tpu_custom_call.1} parent=1 // pred_check
      _
    $region3: #{tpu_custom_call.1} parent=1 // pred_check_branch
      %16 = sbr.rel (0) target = $region5
    $region4: #{tpu_custom_call.1} parent=1 // pred_region
      %18 = vsyncadd [#allocation3], 0
      %s20 = sshll.u32 %s0, 4
      %s21 = int_to_ptr.hbm [resolvable:$true] %s20
      %s22 = sshll.u32 [#allocation2], 4
      %s23 = int_to_ptr.vmem [resolvable:$true] %s22
      %25 = dma.hbm_to_vmem [thread:$0]  %s21, 64, %s23, [#allocation3]
    $region5: #{tpu_custom_call.1} parent=1 // pred_fallthru
      _
    // Predicated region
    $region6: #{tpu_custom_call.1} parent=1 // pred_check
      _
    $region7: #{tpu_custom_call.1} parent=1 // pred_check_branch
      %27 = sbr.rel (0) target = $region9
    $region8: #{tpu_custom_call.1} parent=1 // pred_region
      _
    $region9: #{tpu_custom_call.1} parent=1 // pred_fallthru
      _
    // Predicated region
    $region10: #{tpu_custom_call.1} parent=1 // pred_check
      _
    $region11: #{tpu_custom_call.1} parent=1 // pred_check_branch
      %29 = sbr.rel (0) target = $region13
    $region12: #{tpu_custom_call.1} parent=1 // pred_region
      _
    $region13: #{tpu_custom_call.1} parent=1 // pred_fallthru
      _
    // Predicated region
    $region14: #{tpu_custom_call.1} parent=1 // pred_check
      _
    $region15: #{tpu_custom_call.1} parent=1 // pred_check_branch
      %31 = sbr.rel (0) target = $region17
    $region16: #{tpu_custom_call.1} parent=1 // pred_region
      _
    $region17: #{tpu_custom_call.1} parent=1 // pred_fallthru
      _
    // Predicated region
    $region18: #{tpu_custom_call.1} parent=1 // pred_check
      _
    $region19: #{tpu_custom_call.1} parent=1 // pred_check_branch
      %33 = sbr.rel (0) target = $region21
    $region20: #{tpu_custom_call.1} parent=1 // pred_region
      _
    $region21: #{tpu_custom_call.1} parent=1 // pred_fallthru
      _
    // Predicated region
    $region22: #{tpu_custom_call.1} parent=1 // pred_check
      _
    $region23: #{tpu_custom_call.1} parent=1 // pred_check_branch
      %35 = sbr.rel (0) target = $region25
    $region24: #{tpu_custom_call.1} parent=1 // pred_region
      _
    $region25: #{tpu_custom_call.1} parent=1 // pred_fallthru
      _
    // Predicated region
    $region26: #{tpu_custom_call.1} parent=1 // pred_check
      _
    $region27: #{tpu_custom_call.1} parent=1 // pred_check_branch
      %37 = sbr.rel (0) target = $region29
    $region28: #{tpu_custom_call.1} parent=1 // pred_region
      _
    $region29: #{tpu_custom_call.1} parent=1 // pred_fallthru
      _
    // Predicated region
    $region30: #{tpu_custom_call.1} parent=1 // pred_check
      _
    $region31: #{tpu_custom_call.1} parent=1 // pred_check_branch
      %39 = sbr.rel (0) target = $region33
    $region32: #{tpu_custom_call.1} parent=1 // pred_region
      _
    $region33: #{tpu_custom_call.1} parent=1 // pred_fallthru
      _
    // Predicated region
    $region34: #{tpu_custom_call.1} parent=1 // pred_check
      _
    $region35: #{tpu_custom_call.1} parent=1 // pred_check_branch
      %41 = sbr.rel (0) target = $region37
    $region36: #{tpu_custom_call.1} parent=1 // pred_region
      %43 = dma.done [#allocation3], 64
    $region37: #{tpu_custom_call.1} parent=1 // pred_fallthru
      _
    %v44 = vld [vmem:[%s1] sm:$0xff]
    %v45 = vld [vmem:[%s1 + $0x8] sm:$0x1]
    %v46 = vld [vmem:[#allocation2] sm:$0xf]
    %47 = vrot.lane.b32.xlu0 %v46, 9
    %v48 = vpop.permute.xlu0 %47
    %v49 = vperm.slane %v44, 0
    %v50 = vmul.f32 %v48, %v49
    %51 = vrot.lane.b32.xlu0 %v46, 8
    %v52 = vpop.permute.xlu0 %51
    %v53 = vperm.slane %v44, 1
    %v54 = vmul.f32 %v52, %v53
    %55 = vrot.lane.b32.xlu0 %v46, 7
    %v56 = vpop.permute.xlu0 %55
    %v57 = vperm.slane %v44, 2
    %v58 = vmul.f32 %v56, %v57
    %59 = vrot.lane.b32.xlu0 %v46, 1
    %v60 = vpop.permute.xlu0 %59
    %v61 = vperm.slane %v44, 3
    %v62 = vmul.f32 %v60, %v61
    %v63 = vperm.slane %v44, 4
    %v64 = vmul.f32 %v46, %v63
    %65 = vrot.lane.b32.xlu0 %v46, 127
    %v66 = vpop.permute.xlu0 %65
    %v67 = vperm.slane %v44, 5
    %v68 = vmul.f32 %v66, %v67
    %69 = vrot.lane.b32.xlu0 %v46, 121
    %v70 = vpop.permute.xlu0 %69
    %v71 = vperm.slane %v44, 6
    %v72 = vmul.f32 %v70, %v71
    %73 = vrot.lane.b32.xlu0 %v46, 120
    %v74 = vpop.permute.xlu0 %73
    %v75 = vperm.slane %v44, 7
    %v76 = vmul.f32 %v74, %v75
    %77 = vrot.lane.b32.xlu0 %v46, 119
    %v78 = vpop.permute.xlu0 %77
    %v79 = vperm.slane %v45, 0
    %v80 = vmul.f32 %v78, %v79
    %v82 = vrot.slane %v54, 4
    %v85 = vrot.slane %v62, 4
    %v88 = vrot.slane %v68, 4
    %v91 = vrot.slane %v76, 4
    %vm93 = vcmask 1043456
    %v94 = vsel %vm93, %v50, %v82
    %v95 = vsel %vm93, %v58, %v85
    %v96 = vsel %vm93, %v64, %v88
    %v97 = vsel %vm93, %v72, %v91
    %v98 = vld [vmem:[%s2] sm:$0xff]
    %vm99 = vcmask 293888
    %v101 = vsel %vm99, %v98, 0
    %v104 = vsel %vm93, %v80, 0
    %106 = vmatpush.msra.mxu0 0.0
    %107 = vmatpush.msra.mxu0 0.0
    %108 = vmatpush.msra.mxu0 0.0
    %109 = vmatpush.msra.mxu0 0.0
    %110 = vmatpush.msra.mxu0 0.0
    %111 = vmatpush.msra.mxu0 0.0
    %112 = vmatpush.msra.mxu0 0.0
    %113 = vmatpush.msra.mxu0 0.0
    %114 = vmatpush.msra.mxu0 0.0
    %115 = vmatpush.msra.mxu0 0.0
    %116 = vmatpush.msra.mxu0 0.0
    %117 = vmatpush.msra.mxu0 %v104
    %118 = vmatpush.msra.mxu0 %v97
    %119 = vmatpush.msra.mxu0 %v96
    %120 = vmatpush.msra.mxu0 %v95
    %121 = vmatpush.msra.mxu0 %v94
    %122 = vmatmul.f32.gmra.mxu0 %v101
    %v123 = vpop.f32.mrf.mxu0
    %v124 = vadd.f32 0.0, %v123
    %125 = vdwg.mxu0
    %v126 = vld [vmem:[%s3] sm:$0xff]
    %v127 = vld [vmem:[%s4] sm:$0xff]
    %128 = vadd.xlane.f32.xlu0 %v124
    %v129 = vpop.xlane.xlu0 %128
    %v130 = vmul.f32 %v129, 0.0078125
    %v131 = vsub.f32 %v124, %v130
    %v132 = vmul.f32 %v131, %v131
    %133 = vadd.xlane.f32.xlu0 %v132
    %v134 = vpop.xlane.xlu0 %133
    %v135 = vmul.f32 %v134, 0.0078125
    %v136 = vadd.f32 %v135, 1e-05
    %v137 = vrsqrt.pop %v136
    %v138 = vmul.f32 %v137, %v136
    %v139 = vmul.f32 %v138, %v137
    %v140 = vmul.f32 0.5, %v139
    %v141 = vsub.f32 1.5, %v140
    %v142 = vmul.f32 %v137, %v141
    %vm143 = vweird.f32 %v136
    %vm144 = vweird.f32 %v137
    %vm145 = vmor %vm143, %vm144
    %v146 = vsel %vm145, %v137, %v142
    %v147 = vmul.f32 %v126, %v146
    %149 = vset.pattern.permute.xlu0 0
    %150 = vperm.xlu0 %149, %v147
    %v151 = vpop.permute.xlu0 %150
    %v153 = vmul.f32 %v131, %v151
    %155 = vset.pattern.permute.xlu0 0
    %156 = vperm.xlu0 %155, %v127
    %v157 = vpop.permute.xlu0 %156
    %v159 = vadd.f32 %v153, %v157
    %v160 = vmax.f32 %v159, 0.0
    %161 = vrot.lane.b32.xlu0 %v160, 9
    %v162 = vpop.permute.xlu0 %161
    %v163 = vmul.f32 %v162, %v49
    %164 = vrot.lane.b32.xlu0 %v160, 8
    %v165 = vpop.permute.xlu0 %164
    %v166 = vmul.f32 %v165, %v53
    %167 = vrot.lane.b32.xlu0 %v160, 7
    %v168 = vpop.permute.xlu0 %167
    %v169 = vmul.f32 %v168, %v57
    %170 = vrot.lane.b32.xlu0 %v160, 1
    %v171 = vpop.permute.xlu0 %170
    %v172 = vmul.f32 %v171, %v61
    %v173 = vmul.f32 %v160, %v63
    %174 = vrot.lane.b32.xlu0 %v160, 127
    %v175 = vpop.permute.xlu0 %174
    %v176 = vmul.f32 %v175, %v67
    %177 = vrot.lane.b32.xlu0 %v160, 121
    %v178 = vpop.permute.xlu0 %177
    %v179 = vmul.f32 %v178, %v71
    %180 = vrot.lane.b32.xlu0 %v160, 120
    %v181 = vpop.permute.xlu0 %180
    %v182 = vmul.f32 %v181, %v75
    %183 = vrot.lane.b32.xlu0 %v160, 119
    %v184 = vpop.permute.xlu0 %183
    %v185 = vmul.f32 %v184, %v79
    %v186 = vld [vmem:[%s5] sm:$0xff]
    %vm187 = vcmask 588800
    %v189 = vsel %vm187, %v186, 0
    %191 = vmatpush.msra.mxu0 0.0
    %192 = vmatpush.msra.mxu0 0.0
    %193 = vmatpush.msra.mxu0 0.0
    %194 = vmatpush.msra.mxu0 0.0
    %195 = vmatpush.msra.mxu0 0.0
    %196 = vmatpush.msra.mxu0 0.0
    %197 = vmatpush.msra.mxu0 0.0
    %198 = vmatpush.msra.mxu0 %v185
    %199 = vmatpush.msra.mxu0 %v182
    %200 = vmatpush.msra.mxu0 %v179
    %201 = vmatpush.msra.mxu0 %v176
    %202 = vmatpush.msra.mxu0 %v173
    %203 = vmatpush.msra.mxu0 %v172
    %204 = vmatpush.msra.mxu0 %v169
    %205 = vmatpush.msra.mxu0 %v166
    %206 = vmatpush.msra.mxu0 %v163
    %207 = vmatmul.f32.gmra.mxu0 %v189
    %v208 = vpop.f32.mrf.mxu0
    %v209 = vadd.f32 0.0, %v208
    %210 = vdwg.mxu0
    %v211 = vld [vmem:[%s6] sm:$0xff]
    %v212 = vld [vmem:[%s7] sm:$0xff]
    %213 = vadd.xlane.f32.xlu0 %v209
    %v214 = vpop.xlane.xlu0 %213
    %v215 = vmul.f32 %v214, 0.0078125
    %v216 = vsub.f32 %v209, %v215
    %v217 = vmul.f32 %v216, %v216
    %218 = vadd.xlane.f32.xlu0 %v217
    %v219 = vpop.xlane.xlu0 %218
    %v220 = vmul.f32 %v219, 0.0078125
    %v221 = vadd.f32 %v220, 1e-05
    %v222 = vrsqrt.pop %v221
    %v223 = vmul.f32 %v222, %v221
    %v224 = vmul.f32 %v223, %v222
    %v225 = vmul.f32 0.5, %v224
    %v226 = vsub.f32 1.5, %v225
    %v227 = vmul.f32 %v222, %v226
    %vm228 = vweird.f32 %v221
    %vm229 = vweird.f32 %v222
    %vm230 = vmor %vm228, %vm229
    %v231 = vsel %vm230, %v222, %v227
    %v232 = vmul.f32 %v211, %v231
    %234 = vset.pattern.permute.xlu0 0
    %235 = vperm.xlu0 %234, %v232
    %v236 = vpop.permute.xlu0 %235
    %v238 = vmul.f32 %v216, %v236
    %240 = vset.pattern.permute.xlu0 0
    %241 = vperm.xlu0 %240, %v212
    %v242 = vpop.permute.xlu0 %241
    %v244 = vadd.f32 %v238, %v242
    %v245 = vmax.f32 %v244, 0.0
    %246 = vst [vmem:[#allocation5] sm:$0xff] %v245
    // Predicated region
    $region38: #{tpu_custom_call.1} parent=1 // pred_check
      _
    $region39: #{tpu_custom_call.1} parent=1 // pred_check_branch
      %248 = sbr.rel (0) target = $region41
    $region40: #{tpu_custom_call.1} parent=1 // pred_region
      %250 = vsyncadd [#allocation4], 0
      %s252 = sshll.u32 [#allocation5], 4
      %s253 = int_to_ptr.vmem [resolvable:$true] %s252
      %s254 = sshll.u32 %s8, 4
      %s255 = int_to_ptr.hbm [resolvable:$true] %s254
      %257 = dma.vmem_to_hbm [thread:$0]  %s253, 128, %s255, [#allocation4]
    $region41: #{tpu_custom_call.1} parent=1 // pred_fallthru
      _
    // Predicated region
    $region42: #{tpu_custom_call.1} parent=1 // pred_check
      _
    $region43: #{tpu_custom_call.1} parent=1 // pred_check_branch
      %259 = sbr.rel (0) target = $region45
    $region44: #{tpu_custom_call.1} parent=1 // pred_region
      %261 = dma.done [#allocation4], 128
    $region45: #{tpu_custom_call.1} parent=1 // pred_fallthru
      _
    %262 = vsyncpa [#allocation3], 1
    %263 = vsyncpa [#allocation4], 1

</llo_original>
